<compile_context>
chip_gen: v5e
topology: v5e:2x2
jax: 0.10.0
libtpu: 0.0.40
codegen_flags: <defaults>
</compile_context>

<pallas_src>
import jax
import jax.numpy as jnp
from jax import lax
from jax.experimental import pallas as pl
from jax.experimental.pallas import tpu as pltpu

N_IN = 4
N_OUT = 2

_TILE_TARGET = 32 * 1024  # rows per grid step (~1 MiB useful bytes / step)


def _round_up(x: int, m: int) -> int:
    return ((x + m - 1) // m) * m


def _pick_tile_b(b: int) -> int:
    """Tile rows per grid step: lane-aligned, VMEM-bounded, >=2 tiles when big."""
    if b <= 1024:
        # Tiny batch: one whole-array tile (block dim == array dim is legal).
        return b
    # Multiple of 128 (lane rule), capped for VMEM, and always producing at
    # least 2 tiles so both v7x TensorCores get work.
    return min(_TILE_TARGET, _round_up(-(-b // 2), 128))


def _make_kernel(batch: int, tile_b: int, mask_tail: bool):
    def kernel(x_ref, w_ref, t_ref, y_ref, loss_ref):
        # x_ref: (N_IN, tile_b) f32 VMEM (feature-major, lane-dense)
        # w_ref: (N_OUT, N_IN)  f32 SMEM (nn.Linear.weight layout, untransposed)
        # t_ref: (N_OUT, tile_b) f32 VMEM
        # y_ref: (N_OUT, tile_b) f32 VMEM
        # loss_ref: (1, 1) f32 SMEM (per-tile partial sum of squared error)
        sq = None
        for j in range(N_OUT):
            # Unrolled VPU MAC over the K=4 contraction; w_ref[j, k] is a cheap
            # SMEM scalar broadcast.  Computes (W @ x)[j, :] with the Linear
            # transpose fused -- no MXU round trip for a (B,4)x(4,2) matmul.
            acc = x_ref[0:1, :] * w_ref[j, 0]
            for k in range(1, N_IN):
                acc = acc + x_ref[k:k + 1, :] * w_ref[j, k]
            y_ref[j:j + 1, :] = acc          # full 128-lane row store
            d = acc - t_ref[j:j + 1, :]
            sq = d * d if sq is None else sq + d * d

        if mask_tail:
            # Ragged last tile: drop padded columns (>= batch) from the loss.
            col = (pl.program_id(0) * tile_b
                   + lax.broadcasted_iota(jnp.int32, (1, tile_b), 1))
            sq = jnp.where(col < batch, sq, jnp.float32(0.0))

        loss_ref[0, 0] = jnp.sum(sq)

    return kernel


def learn_matrix_forward(idx, weight, targets=None):
    """Equivalent of LearnMatrix.forward(idx, targets).

    idx:     (B, n_in)  float32
    weight:  (n_out, n_in) float32 (same layout as nn.Linear.weight)
    targets: (B, n_out) float32 or None
    returns: None if targets is None, else (y, loss) with y (B, n_out) f32 and
             loss a scalar f32 (MSELoss, reduction='mean').
    """
    if targets is None:
        return None

    B = idx.shape[0]
    tile_b = _pick_tile_b(B)
    num_tiles = pl.cdiv(B, tile_b)
    mask_tail = (B % tile_b) != 0

    # One-time wrapper transposes to the feature-major, lane-dense layout.
    x_fm = idx.T       # (N_IN, B)
    t_fm = targets.T   # (N_OUT, B)

    kernel = _make_kernel(B, tile_b, mask_tail)

    y_fm, loss_partials = pl.pallas_call(
        kernel,
        out_shape=(
            jax.ShapeDtypeStruct((N_OUT, B), jnp.float32),
            jax.ShapeDtypeStruct((num_tiles, 1), jnp.float32),
        ),
        grid=(num_tiles,),
        in_specs=[
            pl.BlockSpec((N_IN, tile_b), lambda i: (0, i)),     # x tile   (VMEM)
            pl.BlockSpec(memory_space=pltpu.SMEM),              # weight   (SMEM, whole)
            pl.BlockSpec((N_OUT, tile_b), lambda i: (0, i)),    # targets  (VMEM)
        ],
        out_specs=(
            pl.BlockSpec((N_OUT, tile_b), lambda i: (0, i)),    # y tile   (VMEM)
            pl.BlockSpec((1, 1), lambda i: (i, 0),
                         memory_space=pltpu.SMEM),              # partial loss
        ),
        compiler_params=pltpu.CompilerParams(
            dimension_semantics=("parallel",)),
    )(x_fm, weight, t_fm)

    loss = jnp.sum(loss_partials) / jnp.float32(B * N_OUT)
    return y_fm.T, loss


if __name__ == "__main__":
    key = jax.random.PRNGKey(0)
    k_w, k_x, k_t = jax.random.split(key, 3)

    # Deterministic init matching nn.Linear(4, 2, bias=False): weight is
    # (n_out, n_in), uniform(-1/sqrt(n_in), 1/sqrt(n_in)) like PyTorch.
    bound = 1.0 / jnp.sqrt(jnp.float32(N_IN))
    weight = jax.random.uniform(
        k_w, (N_OUT, N_IN), dtype=jnp.float32, minval=-bound, maxval=bound
    )

    # Primary small case (matches the module's toy usage).
    B = 8
    idx = jax.random.normal(k_x, (B, N_IN), dtype=jnp.float32)
    targets = jax.random.normal(k_t, (B, N_OUT), dtype=jnp.float32)

    y, loss = learn_matrix_forward(idx, weight, targets)
    jax.block_until_ready((y, loss))

    y_ref = idx @ weight.T
    loss_ref = jnp.mean((y_ref - targets) ** 2)
    assert jnp.allclose(y, y_ref, atol=1e-5, rtol=1e-5), "y mismatch (B=8)"
    assert jnp.allclose(loss, loss_ref, atol=1e-5, rtol=1e-5), "loss mismatch (B=8)"

    # Secondary case exercising the multi-tile grid + ragged-tail mask path.
    B2 = 1300
    k_x2, k_t2 = jax.random.split(k_x)
    idx2 = jax.random.normal(k_x2, (B2, N_IN), dtype=jnp.float32)
    targets2 = jax.random.normal(k_t2, (B2, N_OUT), dtype=jnp.float32)

    y2, loss2 = learn_matrix_forward(idx2, weight, targets2)
    jax.block_until_ready((y2, loss2))

    y2_ref = idx2 @ weight.T
    loss2_ref = jnp.mean((y2_ref - targets2) ** 2)
    assert jnp.allclose(y2, y2_ref, atol=1e-5, rtol=1e-5), "y mismatch (B=1300)"
    assert jnp.allclose(loss2, loss2_ref, atol=1e-4, rtol=1e-5), "loss mismatch (B=1300)"

    # targets is None -> None, matching the PyTorch module.
    assert learn_matrix_forward(idx, weight, None) is None

    print("KERNEL_OK")
</pallas_src>

<mosaic_0001>
module attributes {stable_mosaic.version = 11 : i64} {
  func.func @kernel(%arg0: i32, %arg1: memref<4x8xf32, #tpu.memory_space<vmem>>, %arg2: memref<2x4xf32, #tpu.memory_space<smem>>, %arg3: memref<2x8xf32, #tpu.memory_space<vmem>>, %arg4: memref<2x8xf32, #tpu.memory_space<vmem>>, %arg5: memref<1x1xf32, #tpu.memory_space<smem>>) attributes {dimension_semantics = [#tpu.dimension_semantics<parallel>], iteration_bounds = array<i64: 1>, scalar_prefetch = 0 : i64, scratch_operands = 0 : i64, tpu.core_type = #tpu.core_type<tc>, window_params = [{transform_indices = @transform_0, window_bounds = array<i64: 4, 8>}, {transform_indices = @transform_1, window_bounds = array<i64: 2, 4>}, {transform_indices = @transform_2, window_bounds = array<i64: 2, 8>}, {transform_indices = @transform_3, window_bounds = array<i64: 2, 8>}, {transform_indices = @transform_4, window_bounds = array<i64: 1, 1>}]} {
    %c0 = arith.constant 0 : index
    %c0_0 = arith.constant 0 : index
    %0 = vector.load %arg1[%c0, %c0_0] : memref<4x8xf32, #tpu.memory_space<vmem>>, vector<1x8xf32>
    %c0_1 = arith.constant 0 : index
    %c0_2 = arith.constant 0 : index
    %1 = memref.load %arg2[%c0_1, %c0_2] : memref<2x4xf32, #tpu.memory_space<smem>>
    %2 = vector.broadcast %1 : f32 to vector<1x8xf32>
    %3 = arith.mulf %0, %2 : vector<1x8xf32>
    %c1 = arith.constant 1 : index
    %c0_3 = arith.constant 0 : index
    %4 = vector.load %arg1[%c1, %c0_3] : memref<4x8xf32, #tpu.memory_space<vmem>>, vector<1x8xf32>
    %c0_4 = arith.constant 0 : index
    %c1_5 = arith.constant 1 : index
    %5 = memref.load %arg2[%c0_4, %c1_5] : memref<2x4xf32, #tpu.memory_space<smem>>
    %6 = vector.broadcast %5 : f32 to vector<1x8xf32>
    %7 = arith.mulf %4, %6 : vector<1x8xf32>
    %8 = arith.addf %3, %7 : vector<1x8xf32>
    %c2 = arith.constant 2 : index
    %c0_6 = arith.constant 0 : index
    %9 = vector.load %arg1[%c2, %c0_6] : memref<4x8xf32, #tpu.memory_space<vmem>>, vector<1x8xf32>
    %c0_7 = arith.constant 0 : index
    %c2_8 = arith.constant 2 : index
    %10 = memref.load %arg2[%c0_7, %c2_8] : memref<2x4xf32, #tpu.memory_space<smem>>
    %11 = vector.broadcast %10 : f32 to vector<1x8xf32>
    %12 = arith.mulf %9, %11 : vector<1x8xf32>
    %13 = arith.addf %8, %12 : vector<1x8xf32>
    %c3 = arith.constant 3 : index
    %c0_9 = arith.constant 0 : index
    %14 = vector.load %arg1[%c3, %c0_9] : memref<4x8xf32, #tpu.memory_space<vmem>>, vector<1x8xf32>
    %c0_10 = arith.constant 0 : index
    %c3_11 = arith.constant 3 : index
    %15 = memref.load %arg2[%c0_10, %c3_11] : memref<2x4xf32, #tpu.memory_space<smem>>
    %16 = vector.broadcast %15 : f32 to vector<1x8xf32>
    %17 = arith.mulf %14, %16 : vector<1x8xf32>
    %18 = arith.addf %13, %17 : vector<1x8xf32>
    %c0_12 = arith.constant 0 : index
    %c0_13 = arith.constant 0 : index
    %19 = vector.load %arg4[%c0_12, %c0_13] : memref<2x8xf32, #tpu.memory_space<vmem>>, vector<1x8xf32>
    tpu.vector_store %arg4[%c0_12, %c0_13], %18 {strides = array<i32>} : memref<2x8xf32, #tpu.memory_space<vmem>>, vector<1x8xf32>,
    %c0_14 = arith.constant 0 : index
    %c0_15 = arith.constant 0 : index
    %20 = vector.load %arg3[%c0_14, %c0_15] : memref<2x8xf32, #tpu.memory_space<vmem>>, vector<1x8xf32>
    %21 = arith.subf %18, %20 : vector<1x8xf32>
    %22 = arith.mulf %21, %21 : vector<1x8xf32>
    %c0_16 = arith.constant 0 : index
    %c0_17 = arith.constant 0 : index
    %23 = vector.load %arg1[%c0_16, %c0_17] : memref<4x8xf32, #tpu.memory_space<vmem>>, vector<1x8xf32>
    %c1_18 = arith.constant 1 : index
    %c0_19 = arith.constant 0 : index
    %24 = memref.load %arg2[%c1_18, %c0_19] : memref<2x4xf32, #tpu.memory_space<smem>>
    %25 = vector.broadcast %24 : f32 to vector<1x8xf32>
    %26 = arith.mulf %23, %25 : vector<1x8xf32>
    %c1_20 = arith.constant 1 : index
    %c0_21 = arith.constant 0 : index
    %27 = vector.load %arg1[%c1_20, %c0_21] : memref<4x8xf32, #tpu.memory_space<vmem>>, vector<1x8xf32>
    %c1_22 = arith.constant 1 : index
    %c1_23 = arith.constant 1 : index
    %28 = memref.load %arg2[%c1_22, %c1_23] : memref<2x4xf32, #tpu.memory_space<smem>>
    %29 = vector.broadcast %28 : f32 to vector<1x8xf32>
    %30 = arith.mulf %27, %29 : vector<1x8xf32>
    %31 = arith.addf %26, %30 : vector<1x8xf32>
    %c2_24 = arith.constant 2 : index
    %c0_25 = arith.constant 0 : index
    %32 = vector.load %arg1[%c2_24, %c0_25] : memref<4x8xf32, #tpu.memory_space<vmem>>, vector<1x8xf32>
    %c1_26 = arith.constant 1 : index
    %c2_27 = arith.constant 2 : index
    %33 = memref.load %arg2[%c1_26, %c2_27] : memref<2x4xf32, #tpu.memory_space<smem>>
    %34 = vector.broadcast %33 : f32 to vector<1x8xf32>
    %35 = arith.mulf %32, %34 : vector<1x8xf32>
    %36 = arith.addf %31, %35 : vector<1x8xf32>
    %c3_28 = arith.constant 3 : index
    %c0_29 = arith.constant 0 : index
    %37 = vector.load %arg1[%c3_28, %c0_29] : memref<4x8xf32, #tpu.memory_space<vmem>>, vector<1x8xf32>
    %c1_30 = arith.constant 1 : index
    %c3_31 = arith.constant 3 : index
    %38 = memref.load %arg2[%c1_30, %c3_31] : memref<2x4xf32, #tpu.memory_space<smem>>
    %39 = vector.broadcast %38 : f32 to vector<1x8xf32>
    %40 = arith.mulf %37, %39 : vector<1x8xf32>
    %41 = arith.addf %36, %40 : vector<1x8xf32>
    %c1_32 = arith.constant 1 : index
    %c0_33 = arith.constant 0 : index
    %42 = vector.load %arg4[%c1_32, %c0_33] : memref<2x8xf32, #tpu.memory_space<vmem>>, vector<1x8xf32>
    tpu.vector_store %arg4[%c1_32, %c0_33], %41 {strides = array<i32>} : memref<2x8xf32, #tpu.memory_space<vmem>>, vector<1x8xf32>,
    %c1_34 = arith.constant 1 : index
    %c0_35 = arith.constant 0 : index
    %43 = vector.load %arg3[%c1_34, %c0_35] : memref<2x8xf32, #tpu.memory_space<vmem>>, vector<1x8xf32>
    %44 = arith.subf %41, %43 : vector<1x8xf32>
    %45 = arith.mulf %44, %44 : vector<1x8xf32>
    %46 = arith.addf %22, %45 : vector<1x8xf32>
    %47 = vector.shape_cast %46 : vector<1x8xf32> to vector<1x1x8xf32>
    %cst = arith.constant dense<0.000000e+00> : vector<1xf32>
    %48 = vector.multi_reduction <add>, %47, %cst [1, 2] : vector<1x1x8xf32> to vector<1xf32>
    %49 = vector.shape_cast %48 : vector<1xf32> to vector<1x1x1xf32>
    %50 = vector.extract %49[0, 0, 0] : f32 from vector<1x1x1xf32>
    %c0_36 = arith.constant 0 : index
    %c0_37 = arith.constant 0 : index
    %51 = memref.load %arg5[%c0_36, %c0_37] : memref<1x1xf32, #tpu.memory_space<smem>>
    memref.store %50, %arg5[%c0_36, %c0_37] : memref<1x1xf32, #tpu.memory_space<smem>>
    return
  }
  func.func @transform_0(%arg0: i32) -> (i32, i32) {
    %c0_i32 = arith.constant 0 : i32
    %c0_i32_0 = arith.constant 0 : i32
    return %c0_i32, %arg0 : i32, i32
  }
  func.func @transform_1(%arg0: i32) -> (i32, i32) {
    %c0_i32 = arith.constant 0 : i32
    %c0_i32_0 = arith.constant 0 : i32
    %c0_i32_1 = arith.constant 0 : i32
    return %c0_i32, %c0_i32_0 : i32, i32
  }
  func.func @transform_2(%arg0: i32) -> (i32, i32) {
    %c0_i32 = arith.constant 0 : i32
    %c0_i32_0 = arith.constant 0 : i32
    return %c0_i32, %arg0 : i32, i32
  }
  func.func @transform_3(%arg0: i32) -> (i32, i32) {
    %c0_i32 = arith.constant 0 : i32
    %c0_i32_0 = arith.constant 0 : i32
    return %c0_i32, %arg0 : i32, i32
  }
  func.func @transform_4(%arg0: i32) -> (i32, i32) {
    %c0_i32 = arith.constant 0 : i32
    %c0_i32_0 = arith.constant 0 : i32
    return %arg0, %c0_i32 : i32, i32
  }
}

</mosaic_0001>

<llo_original>
// kernel: tpu_custom_call.1
$region0: #{tpu_custom_call.1}
  #allocation0 [shape = 'u32[]', space=smem, size = 0x4, offset = 0x4, fixed_abs, tag = 'smem constant byte address 0x4 - core index']
  #allocation1 [shape = 'u32[72,128]{1,0:T(1,128)}', space=vmem, size = 0x9000, scoped, tag = 'internal scratch']
  %s0 = inlined_call_operand.hbm [shape: f32[4,8], index: 0, kind: input, shape index: {}]
  %s1 = inlined_call_operand.hbm [shape: f32[2,4], index: 1, kind: input, shape index: {}]
  %s2 = inlined_call_operand.hbm [shape: f32[2,8], index: 2, kind: input, shape index: {}]
  %s3 = inlined_call_operand.hbm [shape: f32[2,8], index: 3, kind: output, shape index: {0}]
  %s4 = inlined_call_operand.hbm [shape: f32[1,1], index: 4, kind: output, shape index: {1}]
  %5 = xla_tuple %s3, %s4
  %s6 = sld [smem:[#allocation0]]
  $region42: #{tpu_custom_call.1} parent=0
    _
  %s8 = ssub.s32 1, %s6
  %s9 = scalar_select 0, %s8, %s6
  $region1: #{tpu_custom_call.1} parent=0
    #allocation2 [shape = 'u8[2048]{0}', space=vmem, size = 0x800, scoped, tag = 'input window, operand 0, single buffered']
    #allocation3 [shape = 's32[1]{0}', space=sflag, size = 0x4, scoped, tag = 'scoped memory for tpu_custom_call.1']
    #allocation4 [shape = 's32[1]{0}', space=sflag, size = 0x4, scoped, tag = 'scoped memory for tpu_custom_call.1']
    #allocation5 [shape = 's32[1]{0}', space=sflag, size = 0x4, scoped, tag = 'scoped memory for tpu_custom_call.1']
    #allocation6 [shape = 's32[1]{0}', space=sflag, size = 0x4, scoped, tag = 'scoped memory for tpu_custom_call.1']
    #allocation7 [shape = 'u8[1024]{0}', space=smem, size = 0x400, scoped, tag = 'input window, operand 1, single buffered']
    #allocation8 [shape = 'u8[1024]{0}', space=vmem, size = 0x400, scoped, tag = 'input window, operand 2, single buffered']
    #allocation9 [shape = 's32[1]{0}', space=sflag, size = 0x4, scoped, tag = 'scoped memory for tpu_custom_call.1']
    #allocation10 [shape = 'u8[1024]{0}', space=vmem, size = 0x400, scoped, tag = 'output window, operand 0, single buffered']
    #allocation11 [shape = 'u8[512]{0}', space=smem, size = 0x200, scoped, tag = 'output window, operand 1, single buffered']
    %10 = vsyncpa [#allocation3], 0
    %11 = vsyncpa [#allocation5], 0
    %12 = vsyncpa [#allocation9], 0
    %13 = vsyncpa [#allocation4], 0
    %14 = vsyncpa [#allocation6], 0
    // Predicated region
    $region2: #{tpu_custom_call.1} parent=1 // pred_check
      _
    $region3: #{tpu_custom_call.1} parent=1 // pred_check_branch
      %16 = sbr.rel (0) target = $region5
    $region4: #{tpu_custom_call.1} parent=1 // pred_region
      %18 = vsyncadd [#allocation3], 0
      %s20 = sshll.u32 %s0, 4
      %s21 = int_to_ptr.hbm [resolvable:$true] %s20
      %s22 = sshll.u32 [#allocation2], 4
      %s23 = int_to_ptr.vmem [resolvable:$true] %s22
      %25 = dma.hbm_to_vmem [thread:$0]  %s21, 64, %s23, [#allocation3]
    $region5: #{tpu_custom_call.1} parent=1 // pred_fallthru
      _
    // Predicated region
    $region6: #{tpu_custom_call.1} parent=1 // pred_check
      _
    $region7: #{tpu_custom_call.1} parent=1 // pred_check_branch
      %27 = sbr.rel (0) target = $region9
    $region8: #{tpu_custom_call.1} parent=1 // pred_region
      %29 = vsyncadd [#allocation5], 0
      %s31 = sshll.u32 %s1, 4
      %s32 = int_to_ptr.hbm [resolvable:$true] %s31
      %34 = dma.hbm_to_smem %s32, 32, [#allocation7], [#allocation5]
    $region9: #{tpu_custom_call.1} parent=1 // pred_fallthru
      _
    // Predicated region
    $region10: #{tpu_custom_call.1} parent=1 // pred_check
      _
    $region11: #{tpu_custom_call.1} parent=1 // pred_check_branch
      %36 = sbr.rel (0) target = $region13
    $region12: #{tpu_custom_call.1} parent=1 // pred_region
      %38 = vsyncadd [#allocation9], 0
      %s40 = sshll.u32 %s2, 4
      %s41 = int_to_ptr.hbm [resolvable:$true] %s40
      %s42 = sshll.u32 [#allocation8], 4
      %s43 = int_to_ptr.vmem [resolvable:$true] %s42
      %45 = dma.hbm_to_vmem [thread:$0]  %s41, 32, %s43, [#allocation9]
    $region13: #{tpu_custom_call.1} parent=1 // pred_fallthru
      _
    // Predicated region
    $region14: #{tpu_custom_call.1} parent=1 // pred_check
      _
    $region15: #{tpu_custom_call.1} parent=1 // pred_check_branch
      %47 = sbr.rel (0) target = $region17
    $region16: #{tpu_custom_call.1} parent=1 // pred_region
      %49 = dma.done [#allocation3], 64
    $region17: #{tpu_custom_call.1} parent=1 // pred_fallthru
      _
    // Predicated region
    $region18: #{tpu_custom_call.1} parent=1 // pred_check
      _
    $region19: #{tpu_custom_call.1} parent=1 // pred_check_branch
      %51 = sbr.rel (0) target = $region21
    $region20: #{tpu_custom_call.1} parent=1 // pred_region
      %53 = dma.done [#allocation5], 32
    $region21: #{tpu_custom_call.1} parent=1 // pred_fallthru
      _
    // Predicated region
    $region22: #{tpu_custom_call.1} parent=1 // pred_check
      _
    $region23: #{tpu_custom_call.1} parent=1 // pred_check_branch
      %55 = sbr.rel (0) target = $region25
    $region24: #{tpu_custom_call.1} parent=1 // pred_region
      %57 = dma.done [#allocation9], 32
    $region25: #{tpu_custom_call.1} parent=1 // pred_fallthru
      _
    %58 = sfence
    %v59 = vld [vmem:[#allocation2] sm:$0x1]
    %s60 = sld [smem:[#allocation7]]
    %v61 = vstv %s60
    %v62 = vmul.f32 %v59, %v61
    %v63 = vld [vmem:[#allocation2 + $0x1] sm:$0x1]
    %s64 = sld [smem:[#allocation7 + $0x1]]
    %v65 = vstv %s64
    %v66 = vmul.f32 %v63, %v65
    %v67 = vadd.f32 %v62, %v66
    %v68 = vld [vmem:[#allocation2 + $0x2] sm:$0x1]
    %s69 = sld [smem:[#allocation7 + $0x2]]
    %v70 = vstv %s69
    %v71 = vmul.f32 %v68, %v70
    %v72 = vadd.f32 %v67, %v71
    %v73 = vld [vmem:[#allocation2 + $0x3] sm:$0x1]
    %s74 = sld [smem:[#allocation7 + $0x3]]
    %v75 = vstv %s74
    %v76 = vmul.f32 %v73, %v75
    %v77 = vadd.f32 %v72, %v76
    %vm78 = vcmask 57344
    %79 = vst.msk [vmem:[#allocation10] sm:$0x1] %vm78, %v77
    %v80 = vld [vmem:[#allocation8] sm:$0x1]
    %v81 = vsub.f32 %v77, %v80
    %v82 = vmul.f32 %v81, %v81
    %v83 = vld [vmem:[#allocation2] sm:$0x1]
    %s84 = sld [smem:[#allocation7 + $0x80]]
    %v85 = vstv %s84
    %v86 = vmul.f32 %v83, %v85
    %v87 = vld [vmem:[#allocation2 + $0x1] sm:$0x1]
    %s88 = sld [smem:[#allocation7 + $0x81]]
    %v89 = vstv %s88
    %v90 = vmul.f32 %v87, %v89
    %v91 = vadd.f32 %v86, %v90
    %v92 = vld [vmem:[#allocation2 + $0x2] sm:$0x1]
    %s93 = sld [smem:[#allocation7 + $0x82]]
    %v94 = vstv %s93
    %v95 = vmul.f32 %v92, %v94
    %v96 = vadd.f32 %v91, %v95
    %v97 = vld [vmem:[#allocation2 + $0x3] sm:$0x1]
    %s98 = sld [smem:[#allocation7 + $0x83]]
    %v99 = vstv %s98
    %v100 = vmul.f32 %v97, %v99
    %v101 = vadd.f32 %v96, %v100
    %102 = vst.msk [vmem:[#allocation10 + $0x1] sm:$0x1] %vm78, %v101
    %v103 = vld [vmem:[#allocation8 + $0x1] sm:$0x1]
    %v104 = vsub.f32 %v101, %v103
    %v105 = vmul.f32 %v104, %v104
    %v106 = vadd.f32 %v82, %v105
    %v107 = vsel %vm78, %v106, 0.0
    %108 = vadd.xlane.f32.xlu0 %v107
    %v109 = vpop.xlane.xlu0 %108
    %v110 = vrot.slane %v109, 4
    %v111 = vadd.f32 %v109, %v110
    %v112 = vrot.slane %v111, 2
    %v113 = vadd.f32 %v111, %v112
    %v114 = vrot.slane %v113, 1
    %v115 = vadd.f32 %v113, %v114
    %s116 = vtos %v115
    %s117 = scalar_lea.smem [#allocation11], 0
    %118 = sst [smem:[%s117]] %s116
    // Predicated region
    $region26: #{tpu_custom_call.1} parent=1 // pred_check
      _
    $region27: #{tpu_custom_call.1} parent=1 // pred_check_branch
      %120 = sbr.rel (0) target = $region29
    $region28: #{tpu_custom_call.1} parent=1 // pred_region
      %122 = vsyncadd [#allocation4], 0
      %s124 = sshll.u32 [#allocation10], 4
      %s125 = int_to_ptr.vmem [resolvable:$true] %s124
      %s126 = sshll.u32 %s3, 4
      %s127 = int_to_ptr.hbm [resolvable:$true] %s126
      %129 = dma.vmem_to_hbm [thread:$0]  %s125, 32, %s127, [#allocation4]
    $region29: #{tpu_custom_call.1} parent=1 // pred_fallthru
      _
    // Predicated region
    $region30: #{tpu_custom_call.1} parent=1 // pred_check
      _
    $region31: #{tpu_custom_call.1} parent=1 // pred_check_branch
      %131 = sbr.rel (0) target = $region33
    $region32: #{tpu_custom_call.1} parent=1 // pred_region
      %133 = vsyncadd [#allocation6], 0
      %s135 = sshll.u32 %s4, 4
      %s136 = int_to_ptr.hbm [resolvable:$true] %s135
      %138 = dma.smem_to_hbm [#allocation11], 16, %s136, [#allocation6]
    $region33: #{tpu_custom_call.1} parent=1 // pred_fallthru
      _
    // Predicated region
    $region34: #{tpu_custom_call.1} parent=1 // pred_check
      _
    $region35: #{tpu_custom_call.1} parent=1 // pred_check_branch
      %140 = sbr.rel (0) target = $region37
    $region36: #{tpu_custom_call.1} parent=1 // pred_region
      %142 = dma.done [#allocation4], 32
    $region37: #{tpu_custom_call.1} parent=1 // pred_fallthru
      _
    // Predicated region
    $region38: #{tpu_custom_call.1} parent=1 // pred_check
      _
    $region39: #{tpu_custom_call.1} parent=1 // pred_check_branch
      %144 = sbr.rel (0) target = $region41
    $region40: #{tpu_custom_call.1} parent=1 // pred_region
      %146 = dma.done [#allocation6], 16
    $region41: #{tpu_custom_call.1} parent=1 // pred_fallthru
      _
    %147 = sfence
    %148 = vsyncpa [#allocation3], 1
    %149 = vsyncpa [#allocation9], 1
    %150 = vsyncpa [#allocation4], 1
    %151 = vsyncpa [#allocation5], 1
    %152 = vsyncpa [#allocation6], 1

</llo_original>
